<compile_context>
chip_gen: v7x
topology: tpu7x:2x2x1
jax: 0.10.0
libtpu: 0.0.40
codegen_flags: <defaults>
</compile_context>

<pallas_src>
import functools

import jax
import jax.numpy as jnp
from jax import lax
from jax.experimental import pallas as pl
from jax.experimental.pallas import tpu as pltpu


def _round_up(x, m):
    return ((x + m - 1) // m) * m


def _vmem_capacity_bytes():
    """Physical VMEM per TensorCore; conservative 64 MiB (v7x) fallback."""
    cap = 64 << 20
    try:
        info = pltpu.get_tpu_info()
        v = int(getattr(info, "vmem_capacity_bytes", cap))
        if v > 0:
            cap = v
    except Exception:
        pass
    return cap


def _num_tensorcores():
    """Best-effort TensorCore-per-chip count (v7x has 2); safe fallback 1."""
    try:
        info = pltpu.get_tpu_info()
        for name in ("num_cores", "core_count", "tensorcores_per_chip",
                     "num_tensorcores"):
            v = getattr(info, name, None)
            if isinstance(v, int) and v > 0:
                return v
    except Exception:
        pass
    return 1


def _footprint_bytes(tb, tn, tk):
    # double-buffered x, W and bias blocks + double-buffered (resident) output
    # block; no separate accumulator scratch.  +2 MiB compiler headroom.
    return 4 * (2 * tb * tk + 2 * tn * tk + 2 * tn + 2 * tb * tn) + (2 << 20)


def _select_tiles(B, K, N, budget_bytes, num_cores):
    # Bigger targets when the chip has the 128 MiB VMEM of v5e/v6e; smaller on
    # v7x (64 MiB / TC) or when the capacity query falls back.
    if budget_bytes >= (80 << 20):
        target_n, target_k = 1024, 4096
    else:
        target_n, target_k = 512, 2048
    target_b = 512

    tile_b = min(target_b, _round_up(B, 8))
    tile_n = N if N <= target_n else target_n      # full dim, or 128-multiple
    tile_k = K if K <= target_k else target_k      # collapse K when it fits

    # Shrink (keeping 128-multiples once a dim is actually tiled) until we fit
    # the generation-aware budget: K first (accumulator is resident, so extra
    # K steps are cheapest), then N, then B.
    while _footprint_bytes(tile_b, tile_n, tile_k) > budget_bytes and tile_k > 512:
        tile_k = max(512, _round_up(tile_k // 2, 128))
    while _footprint_bytes(tile_b, tile_n, tile_k) > budget_bytes and tile_n > 128:
        tile_n = max(128, _round_up(tile_n // 2, 128))
    while _footprint_bytes(tile_b, tile_n, tile_k) > budget_bytes and tile_b > 64:
        tile_b = max(64, _round_up(tile_b // 2, 8))

    # Megacore (v7x): guarantee >=2 blocks along the parallel (i, j) axes so
    # the second TensorCore is not idle.  No-op on 1-TC chips (v5e/v6e), so
    # their HBM traffic is not inflated.
    if num_cores >= 2 and pl.cdiv(B, tile_b) * pl.cdiv(N, tile_n) < 2:
        if N >= 256:
            tile_n = _round_up(pl.cdiv(N, 2), 128)
        elif _round_up(B, 8) >= 16:
            tile_b = _round_up(pl.cdiv(B, 2), 8)

    return tile_b, tile_n, tile_k


def _linear_kernel(x_ref, w_ref, b_ref, o_ref, *, compute_dtype):
    # x_ref: (tile_b, tile_k)   activation tile
    # w_ref: (tile_n, tile_k)   weight tile, native (out, in) layout
    # b_ref: (1, tile_n)        bias tile
    # o_ref: (tile_b, tile_n)   f32 output tile, resident across the K axis
    k = pl.program_id(2)

    @pl.when(k == 0)
    def _():
        # Seed the resident output block with the bias: no separate f32
        # accumulator scratch and no copy/bias-add epilogue pass.
        o_ref[...] = jnp.broadcast_to(b_ref[...], o_ref.shape).astype(o_ref.dtype)

    x = x_ref[...]
    w = w_ref[...]
    if compute_dtype is not None:
        # Optional bf16 MXU path (f32 accumulation kept via
        # preferred_element_type below).
        x = x.astype(compute_dtype)
        w = w.astype(compute_dtype)

    # x @ W^T with no materialized transpose: contract the last (lane) dims of
    # both operands; the MXU's transposed-RHS matmul path handles this.
    # If profiling ever shows a per-k XLU transpose of the weight tile, switch
    # the wrapper to a one-time (K, N) weight layout instead.
    o_ref[...] += lax.dot_general(
        x,
        w,
        dimension_numbers=(((1,), (1,)), ((), ())),
        preferred_element_type=jnp.float32,
    )


def linear_forward(x, weight, bias, *, tile_b=None, tile_n=None, tile_k=None,
                   compute_dtype=None):
    """y = x @ weight.T + bias  (PyTorch nn.Linear forward) as a Pallas kernel.

    x:      (B, in_f)
    weight: (out_f, in_f)   -- nn.Linear layout, used as-is (no transpose)
    bias:   (out_f,)
    compute_dtype: optional (e.g. jnp.bfloat16) in-kernel cast for the MXU dot;
                   accumulation stays f32.
    """
    B, in_f = x.shape
    out_f, in_f2 = weight.shape
    assert in_f == in_f2 and bias.shape == (out_f,)

    cap = _vmem_capacity_bytes()
    budget = min((cap * 3) // 4, 112 << 20)

    tb, tn, tk = _select_tiles(B, in_f, out_f, budget, _num_tensorcores())
    if tile_b is not None:
        tb = tile_b
    if tile_n is not None:
        tn = tile_n
    if tile_k is not None:
        tk = tile_k

    # Only the K (reduction) axis must never read out-of-bounds garbage, so it
    # is either collapsed into a single full-width tile (no padding needed) or
    # zero-padded to a tile_k multiple.  B / N edge blocks need no wrapper-side
    # jnp.pad: Pallas masks the out-of-bounds part of edge-block stores, and
    # padded rows/cols only ever feed masked outputs.
    if tk >= in_f:
        tk = in_f
        K_p = in_f
    else:
        K_p = _round_up(in_f, tk)
    xp = x if K_p == in_f else jnp.pad(x, ((0, 0), (0, K_p - in_f)))
    wp = weight if K_p == in_f else jnp.pad(weight, ((0, 0), (0, K_p - in_f)))
    b2 = bias.reshape(1, out_f)

    grid = (pl.cdiv(B, tb), pl.cdiv(out_f, tn), K_p // tk)

    vmem_need = _footprint_bytes(tb, tn, tk)
    vmem_limit = min(max(vmem_need, 32 << 20), cap - (8 << 20))

    kernel = functools.partial(_linear_kernel, compute_dtype=compute_dtype)

    out = pl.pallas_call(
        kernel,
        out_shape=jax.ShapeDtypeStruct((B, out_f), jnp.float32),
        grid_spec=pltpu.PrefetchScalarGridSpec(
            num_scalar_prefetch=0,
            grid=grid,
            in_specs=[
                pl.BlockSpec((tb, tk), lambda i, j, k: (i, k)),
                # Weight stream dominates HBM traffic in the mem-bound regime;
                # if profiling shows exposed DMA, add
                # pipeline_mode=pl.Buffered(3) here (one extra W tile of VMEM).
                pl.BlockSpec((tn, tk), lambda i, j, k: (j, k)),
                pl.BlockSpec((1, tn), lambda i, j, k: (0, j)),
            ],
            out_specs=pl.BlockSpec((tb, tn), lambda i, j, k: (i, j)),
        ),
        compiler_params=pltpu.CompilerParams(
            dimension_semantics=("parallel", "parallel", "arbitrary"),
            vmem_limit_bytes=vmem_limit,
        ),
    )(xp, wp, b2)

    if out.dtype != x.dtype:
        out = out.astype(x.dtype)
    return out


if __name__ == "__main__":
    # Small shapes consistent with the module: Linear(input_size=32, output_size=16)
    batch = 8
    input_size = 32
    output_size = 16

    key = jax.random.PRNGKey(0)
    kx, kw, kb = jax.random.split(key, 3)

    # Deterministic init mimicking nn.Linear: U(-1/sqrt(in), 1/sqrt(in))
    bound = 1.0 / (input_size ** 0.5)
    weight = jax.random.uniform(
        kw, (output_size, input_size), jnp.float32, minval=-bound, maxval=bound
    )
    bias = jax.random.uniform(
        kb, (output_size,), jnp.float32, minval=-bound, maxval=bound
    )
    x = jax.random.normal(kx, (batch, input_size), jnp.float32)

    # NOTE: at these tiny shapes a plain jit'd `x @ W.T + b` would be as fast;
    # the kernel exists for the large-B / large-feature regime.
    fwd = jax.jit(linear_forward)
    y = jax.block_until_ready(fwd(x, weight, bias))

    # Verify against plain-JAX reference.
    y_ref = x @ weight.T + bias
    assert y.shape == (batch, output_size)
    assert jnp.allclose(y, y_ref, atol=1e-5, rtol=1e-5)

    print("KERNEL_OK")
</pallas_src>

<mosaic_0001>
module attributes {stable_mosaic.version = 11 : i64} {
  func.func @_linear_kernel(%arg0: i32, %arg1: i32, %arg2: i32, %arg3: memref<8x32xf32, #tpu.memory_space<vmem>>, %arg4: memref<16x32xf32, #tpu.memory_space<vmem>>, %arg5: memref<1x16xf32, #tpu.memory_space<vmem>>, %arg6: memref<8x16xf32, #tpu.memory_space<vmem>>) attributes {dimension_semantics = [#tpu.dimension_semantics<parallel>, #tpu.dimension_semantics<parallel>, #tpu.dimension_semantics<arbitrary>], iteration_bounds = array<i64: 1, 1, 1>, scalar_prefetch = 0 : i64, scratch_operands = 0 : i64, tpu.core_type = #tpu.core_type<tc>, window_params = [{transform_indices = @transform_0, window_bounds = array<i64: 8, 32>}, {transform_indices = @transform_1, window_bounds = array<i64: 16, 32>}, {transform_indices = @transform_2, window_bounds = array<i64: 1, 16>}, {transform_indices = @transform_3, window_bounds = array<i64: 8, 16>}]} {
    %c0_i32 = arith.constant 0 : i32
    %0 = arith.cmpi eq, %arg2, %c0_i32 : i32
    %1 = arith.extui %0 : i1 to i32
    %c0_i32_0 = arith.constant 0 : i32
    %2 = arith.cmpi ne, %1, %c0_i32_0 : i32
    scf.if %2 {
      %c0_8 = arith.constant 0 : index
      %c0_9 = arith.constant 0 : index
      %9 = vector.load %arg5[%c0_8, %c0_9] : memref<1x16xf32, #tpu.memory_space<vmem>>, vector<1x16xf32>
      %10 = vector.shape_cast %9 : vector<1x16xf32> to vector<1x16xf32>
      %11 = vector.broadcast %10 : vector<1x16xf32> to vector<8x16xf32>
      %c0_10 = arith.constant 0 : index
      %c0_11 = arith.constant 0 : index
      %12 = vector.load %arg6[%c0_10, %c0_11] : memref<8x16xf32, #tpu.memory_space<vmem>>, vector<8x16xf32>
      tpu.vector_store %arg6[%c0_10, %c0_11], %11 {strides = array<i32>} : memref<8x16xf32, #tpu.memory_space<vmem>>, vector<8x16xf32>,
    } else {
    }
    %c0 = arith.constant 0 : index
    %c0_1 = arith.constant 0 : index
    %3 = vector.load %arg3[%c0, %c0_1] : memref<8x32xf32, #tpu.memory_space<vmem>>, vector<8x32xf32>
    %c0_2 = arith.constant 0 : index
    %c0_3 = arith.constant 0 : index
    %4 = vector.load %arg4[%c0_2, %c0_3] : memref<16x32xf32, #tpu.memory_space<vmem>>, vector<16x32xf32>
    %c0_4 = arith.constant 0 : index
    %c0_5 = arith.constant 0 : index
    %5 = vector.load %arg6[%c0_4, %c0_5] : memref<8x16xf32, #tpu.memory_space<vmem>>, vector<8x16xf32>
    %cst = arith.constant dense<0.000000e+00> : vector<8x16xf32>
    %6 = tpu.matmul %3, %4, %cst {dimension_numbers = #tpu.dot_dimension_numbers<[1], [1], [0], [0], [0, 0, 1, 0], [], []>} : vector<8x32xf32>, vector<16x32xf32>, vector<8x16xf32> -> vector<8x16xf32>
    %7 = arith.addf %5, %6 : vector<8x16xf32>
    %c0_6 = arith.constant 0 : index
    %c0_7 = arith.constant 0 : index
    %8 = vector.load %arg6[%c0_6, %c0_7] : memref<8x16xf32, #tpu.memory_space<vmem>>, vector<8x16xf32>
    tpu.vector_store %arg6[%c0_6, %c0_7], %7 {strides = array<i32>} : memref<8x16xf32, #tpu.memory_space<vmem>>, vector<8x16xf32>,
    return
  }
  func.func @transform_0(%arg0: i32, %arg1: i32, %arg2: i32) -> (i32, i32) {
    %c0_i32 = arith.constant 0 : i32
    return %arg0, %arg2 : i32, i32
  }
  func.func @transform_1(%arg0: i32, %arg1: i32, %arg2: i32) -> (i32, i32) {
    %c0_i32 = arith.constant 0 : i32
    return %arg1, %arg2 : i32, i32
  }
  func.func @transform_2(%arg0: i32, %arg1: i32, %arg2: i32) -> (i32, i32) {
    %c0_i32 = arith.constant 0 : i32
    %c0_i32_0 = arith.constant 0 : i32
    return %c0_i32, %arg1 : i32, i32
  }
  func.func @transform_3(%arg0: i32, %arg1: i32, %arg2: i32) -> (i32, i32) {
    %c0_i32 = arith.constant 0 : i32
    return %arg0, %arg1 : i32, i32
  }
}

</mosaic_0001>

<llo_original>
// kernel: linear_forward.1
$region0: #{linear_forward.1}
  #allocation0 [shape = 'u32[]', space=smem, size = 0x4, offset = 0x4, fixed_abs, tag = 'smem constant byte address 0x4 - core index']
  #allocation1 [shape = 'u32[144,128]{1,0:T(1,128)}', space=vmem, size = 0x12000, scoped, tag = 'internal scratch']
  %s0 = inlined_call_operand.hbm [shape: f32[8,32], index: 0, kind: input, shape index: {}]
  %s1 = inlined_call_operand.hbm [shape: f32[16,32], index: 1, kind: input, shape index: {}]
  %s2 = inlined_call_operand.vmem [shape: f32[1,16], index: 2, kind: input, shape index: {}]
  %s3 = inlined_call_operand.hbm [shape: f32[8,16], index: 3, kind: output, shape index: {}]
  %s4 = sld [smem:[#allocation0]]
  $region34: #{linear_forward.1} parent=0
    _
  %s6 = ssub.s32 1, %s4
  %s7 = scalar_select 0, %s6, %s4
  $region1: #{linear_forward.1} parent=0
    #allocation2 [shape = 'u8[4096]{0}', space=vmem, size = 0x1000, scoped, tag = 'input window, operand 0, single buffered']
    #allocation3 [shape = 's32[1]{0}', space=sflag, size = 0x4, scoped, tag = 'scoped memory for linear_forward.1']
    #allocation4 [shape = 's32[1]{0}', space=sflag, size = 0x4, scoped, tag = 'scoped memory for linear_forward.1']
    #allocation5 [shape = 'u8[8192]{0}', space=vmem, size = 0x2000, scoped, tag = 'input window, operand 1, single buffered']
    #allocation6 [shape = 's32[1]{0}', space=sflag, size = 0x4, scoped, tag = 'scoped memory for linear_forward.1']
    #allocation7 [shape = 'u8[4096]{0}', space=vmem, size = 0x1000, scoped, tag = 'output window, operand 0, single buffered']
    %8 = vsyncpa [#allocation3], 0
    %9 = vsyncpa [#allocation6], 0
    %10 = vsyncpa [#allocation4], 0
    // Predicated region
    $region2: #{linear_forward.1} parent=1 // pred_check
      _
    $region3: #{linear_forward.1} parent=1 // pred_check_branch
      %12 = sbr.rel (0) target = $region5
    $region4: #{linear_forward.1} parent=1 // pred_region
      %s14 = ssub.s32 128, 128
      %15 = vsyncadd [#allocation3], %s14
      %s17 = sshll.u32 [#allocation2], 4
      %s18 = int_to_ptr.vmem [resolvable:$true] %s17
      %20 = dma.hbm_to_vmem [thread:$0]  %s0, 128, %s18, [#allocation3]
    $region5: #{linear_forward.1} parent=1 // pred_fallthru
      _
    // Predicated region
    $region6: #{linear_forward.1} parent=1 // pred_check
      _
    $region7: #{linear_forward.1} parent=1 // pred_check_branch
      %22 = sbr.rel (0) target = $region9
    $region8: #{linear_forward.1} parent=1 // pred_region
      %s24 = ssub.s32 256, 256
      %25 = vsyncadd [#allocation6], %s24
      %s26 = sshll.u32 [#allocation5], 4
      %s27 = int_to_ptr.vmem [resolvable:$true] %s26
      %32 = dma.hbm_to_vmem [thread:$0]  %s1, 256, %s27, [#allocation6], 128, 128, 8
    $region9: #{linear_forward.1} parent=1 // pred_fallthru
      _
    // Predicated region
    $region10: #{linear_forward.1} parent=1 // pred_check
      _
    $region11: #{linear_forward.1} parent=1 // pred_check_branch
      %34 = sbr.rel (0) target = $region13
    $region12: #{linear_forward.1} parent=1 // pred_region
      _
    $region13: #{linear_forward.1} parent=1 // pred_fallthru
      _
    // Predicated region
    $region14: #{linear_forward.1} parent=1 // pred_check
      _
    $region15: #{linear_forward.1} parent=1 // pred_check_branch
      %36 = sbr.rel (0) target = $region17
    $region16: #{linear_forward.1} parent=1 // pred_region
      %37 = dma.done [#allocation3], 128
    $region17: #{linear_forward.1} parent=1 // pred_fallthru
      _
    // Predicated region
    $region18: #{linear_forward.1} parent=1 // pred_check
      _
    $region19: #{linear_forward.1} parent=1 // pred_check_branch
      %39 = sbr.rel (0) target = $region21
    $region20: #{linear_forward.1} parent=1 // pred_region
      %40 = dma.done [#allocation6], 256
    $region21: #{linear_forward.1} parent=1 // pred_fallthru
      _
    %p41 = scmp.eq.s32.totalorder 0, 0
    // Predicated region
    $region22: #{linear_forward.1} parent=1 // pred_check
      %p42 = pneg %p41
    $region23: #{linear_forward.1} parent=1 // pred_check_branch
      %44 = sbr.rel (%p42) target = $region25
    $region24: #{linear_forward.1} parent=1 // pred_region
      %v45 = vld [vmem:[%s2] sm:$0x1]
      %v47 = vlaneseq
      %v48 = vshrl.u32 %v47, 7
      %v49 = vsub.s32 0, %v48
      %v50 = vrot.slane %v45, %v49
      %vm52 = vcmask 130048
      %53 = vst.msk [vmem:[#allocation7] sm:$0xff] %vm52, %v50
    $region25: #{linear_forward.1} parent=1 // pred_fallthru
      _
    %v54 = vld [vmem:[#allocation2] sm:$0xff]
    %v55 = vld [vmem:[#allocation5] sm:$0xff]
    %v56 = vld [vmem:[#allocation5 + $0x8] sm:$0xff]
    %v57 = vld [vmem:[#allocation7] sm:$0xff]
    %vm58 = vcmask 261120
    %v60 = vsel %vm58, %v54, 0
    %v63 = vsel %vm58, %v55, 0
    %v66 = vsel %vm58, %v56, 0
    %68 = vmatprep.subr.mxu0 0.0
    %69 = vmatpush1.xpose.msra.mxu0 %v63
    %70 = vmatprep.subr.mxu0 0.0
    %71 = vmatpush1.xpose.msra.mxu0 %v66
    %72 = vmatprep.subr.mxu0 0.0
    %73 = vmatpush1.xpose.msra.mxu0 0.0
    %74 = vmatprep.subr.mxu0 0.0
    %75 = vmatpush1.xpose.msra.mxu0 0.0
    %76 = vmatprep.subr.mxu0 0.0
    %77 = vmatpush1.xpose.msra.mxu0 0.0
    %78 = vmatprep.subr.mxu0 0.0
    %79 = vmatpush1.xpose.msra.mxu0 0.0
    %80 = vmatprep.subr.mxu0 0.0
    %81 = vmatpush1.xpose.msra.mxu0 0.0
    %82 = vmatprep.subr.mxu0 0.0
    %83 = vmatpush1.xpose.msra.mxu0 0.0
    %84 = vmatprep.subr.mxu0 0.0
    %85 = vmatpush1.xpose.msra.mxu0 0.0
    %86 = vmatprep.subr.mxu0 0.0
    %87 = vmatpush1.xpose.msra.mxu0 0.0
    %88 = vmatprep.subr.mxu0 0.0
    %89 = vmatpush1.xpose.msra.mxu0 0.0
    %90 = vmatprep.subr.mxu0 0.0
    %91 = vmatpush1.xpose.msra.mxu0 0.0
    %92 = vmatprep.subr.mxu0 0.0
    %93 = vmatpush1.xpose.msra.mxu0 0.0
    %94 = vmatprep.subr.mxu0 0.0
    %95 = vmatpush1.xpose.msra.mxu0 0.0
    %96 = vmatprep.subr.mxu0 0.0
    %97 = vmatpush1.xpose.msra.mxu0 0.0
    %98 = vmatprep.subr.mxu0 0.0
    %99 = vmatpush1.xpose.msra.mxu0 0.0
    %100 = vmatprep.subr.mxu0 0.0
    %101 = vmatpush1.xpose.msra.mxu0 0.0
    %102 = vmatprep.subr.mxu0 0.0
    %103 = vmatpush1.xpose.msra.mxu0 0.0
    %104 = vmatprep.subr.mxu0 0.0
    %105 = vmatpush1.xpose.msra.mxu0 0.0
    %106 = vmatprep.subr.mxu0 0.0
    %107 = vmatpush1.xpose.msra.mxu0 0.0
    %108 = vmatprep.subr.mxu0 0.0
    %109 = vmatpush1.xpose.msra.mxu0 0.0
    %110 = vmatprep.subr.mxu0 0.0
    %111 = vmatpush1.xpose.msra.mxu0 0.0
    %112 = vmatprep.subr.mxu0 0.0
    %113 = vmatpush1.xpose.msra.mxu0 0.0
    %114 = vmatprep.subr.mxu0 0.0
    %115 = vmatpush1.xpose.msra.mxu0 0.0
    %116 = vmatprep.subr.mxu0 0.0
    %117 = vmatpush1.xpose.msra.mxu0 0.0
    %118 = vmatprep.subr.mxu0 0.0
    %119 = vmatpush1.xpose.msra.mxu0 0.0
    %120 = vmatprep.subr.mxu0 0.0
    %121 = vmatpush1.xpose.msra.mxu0 0.0
    %122 = vmatprep.subr.mxu0 0.0
    %123 = vmatpush1.xpose.msra.mxu0 0.0
    %124 = vmatprep.subr.mxu0 0.0
    %125 = vmatpush1.xpose.msra.mxu0 0.0
    %126 = vmatprep.subr.mxu0 0.0
    %127 = vmatpush1.xpose.msra.mxu0 0.0
    %128 = vmatprep.subr.mxu0 0.0
    %129 = vmatpush1.xpose.msra.mxu0 0.0
    %130 = vmatprep.subr.mxu0 0.0
    %131 = vmatpush1.xpose.msra.mxu0 0.0
    %132 = vmatprep.mubr.f32.mxu0 0.0
    %133 = vmatmul.mubr.f32.gmra.mrb[0].mxu0 %v60
    %v134 = vpop.f32.mrb[0].mxu0
    %v135 = vadd.f32 0.0, %v134
    %v136 = vpop.f32.mrb[0].mxu0
    %137 = vdwg.mxu0
    %v138 = vadd.f32 %v57, %v135
    %vm139 = vcmask 130048
    %140 = vst.msk [vmem:[#allocation7] sm:$0xff] %vm139, %v138
    // Predicated region
    $region26: #{linear_forward.1} parent=1 // pred_check
      _
    $region27: #{linear_forward.1} parent=1 // pred_check_branch
      %142 = sbr.rel (0) target = $region29
    $region28: #{linear_forward.1} parent=1 // pred_region
      %s144 = ssub.s32 128, 128
      %145 = vsyncadd [#allocation4], %s144
      %s147 = sshll.u32 [#allocation7], 4
      %s148 = int_to_ptr.vmem [resolvable:$true] %s147
      %150 = dma.vmem_to_hbm [thread:$0]  %s148, 128, %s3, [#allocation4]
    $region29: #{linear_forward.1} parent=1 // pred_fallthru
      _
    // Predicated region
    $region30: #{linear_forward.1} parent=1 // pred_check
      _
    $region31: #{linear_forward.1} parent=1 // pred_check_branch
      %152 = sbr.rel (0) target = $region33
    $region32: #{linear_forward.1} parent=1 // pred_region
      %153 = dma.done [#allocation4], 128
    $region33: #{linear_forward.1} parent=1 // pred_fallthru
      _
    %154 = vsyncpa [#allocation3], 1
    %155 = vsyncpa [#allocation6], 1
    %156 = vsyncpa [#allocation4], 1

</llo_original>
